<compile_context>
chip_gen: v7x
topology: tpu7x:2x2x1
jax: 0.10.0
libtpu: 0.0.40
codegen_flags: <defaults>
</compile_context>

<pallas_src>
import jax
import jax.numpy as jnp
from jax.experimental import pallas as pl
from jax.experimental.pallas import tpu as pltpu


def _structure_kernel(x_ref, w1_ref, b1_ref, w2_ref, prior_ref, scal_ref, out_ref):
    """final_adj = (1 - pw) * sigmoid(score_net(pair feats)) + pw * prior_adj.

    x_ref:     [N, H]    causal variable embeddings (f32)
    w1_ref:    [H, 2H]   fused first-layer weights (cols [:H] act on source, [H:] on target)
    b1_ref:    [1, H]    first-layer bias
    w2_ref:    [1, H]    second-layer weights (output dim 1)
    prior_ref: [N, N]    prior adjacency
    scal_ref:  SMEM (2,) = [b2, prior_weight]
    out_ref:   [N, N]
    """
    h = x_ref.shape[1]

    # One fused MXU matmul for both concat halves of Linear1: [N, 2H].
    hcat = jnp.dot(x_ref[...], w1_ref[...], preferred_element_type=jnp.float32)

    a = hcat[:, :h] + b1_ref[...]   # [N, H] contribution of source var i (+ bias)
    b = hcat[:, h:]                 # [N, H] contribution of target var j

    # Pairwise hidden activations for every (i, j) at once: [N, N, H].
    h3 = jnp.maximum(a[:, None, :] + b[None, :, :], 0.0)

    # Linear2: one lane reduction over H for all N*N pairs.
    w2 = w2_ref[...][None, :, :]                     # [1, 1, H]
    s = jnp.sum(h3 * w2, axis=-1) + scal_ref[0]      # [N, N]

    # Sigmoid on the EUP: exp + approximate reciprocal (VPU stays free).
    learned = pl.reciprocal(1.0 + jnp.exp(-s), approx=True)

    # Blend with prior and store the whole adjacency tile in a single dense write.
    pw = scal_ref[1]
    out_ref[...] = (1.0 - pw) * learned + pw * prior_ref[...]


def enhanced_structure_learner(causal_vars, w1, b1, w2, b2, prior_adj, prior_weight):
    """causal_vars: [N, H]; w1: [2H, H]; b1: [H]; w2: [H]; b2: scalar; prior_adj: [N, N]."""
    n, h = causal_vars.shape
    # Fuse the two Linear1 matmuls: concat the source-half / target-half weights along the
    # output dim so a single [N, H] @ [H, 2H] MXU op produces both pre-activations.
    w1_cat = jnp.concatenate([w1[:h, :], w1[h:, :]], axis=1)      # [H, 2H]
    scal = jnp.array([b2, prior_weight], dtype=jnp.float32)

    return pl.pallas_call(
        _structure_kernel,
        out_shape=jax.ShapeDtypeStruct((n, n), jnp.float32),
        in_specs=[pl.BlockSpec(memory_space=pltpu.MemorySpace.VMEM)] * 5
        + [pl.BlockSpec(memory_space=pltpu.MemorySpace.SMEM)],
        out_specs=pl.BlockSpec(memory_space=pltpu.MemorySpace.VMEM),
    )(
        causal_vars.astype(jnp.float32),
        w1_cat.astype(jnp.float32),
        b1.reshape(1, h).astype(jnp.float32),
        w2.reshape(1, h).astype(jnp.float32),
        prior_adj.astype(jnp.float32),
        scal,
    )


def _reference(causal_vars, w1, b1, w2, b2, prior_adj, prior_weight):
    """Plain-JAX reference of the inferred forward pass."""
    n, h = causal_vars.shape
    xi = jnp.repeat(causal_vars, n, axis=0)          # [N*N, H]  (i-major)
    xj = jnp.tile(causal_vars, (n, 1))               # [N*N, H]
    feat = jnp.concatenate([xi, xj], axis=-1)        # [N*N, 2H]
    hid = jax.nn.relu(feat @ w1 + b1)                # [N*N, H]
    score = jax.nn.sigmoid(hid @ w2 + b2).reshape(n, n)
    return (1.0 - prior_weight) * score + prior_weight * prior_adj


if __name__ == "__main__":
    num_vars = 8
    hidden_dim = 32
    prior_weight = 0.3

    key = jax.random.PRNGKey(0)
    k_x, k_w1, k_b1, k_w2, k_b2 = jax.random.split(key, 5)

    # Deterministic parameter init (PyTorch-Linear-style uniform bounds).
    bound1 = 1.0 / jnp.sqrt(2.0 * hidden_dim)
    w1 = jax.random.uniform(k_w1, (2 * hidden_dim, hidden_dim), jnp.float32, -bound1, bound1)
    b1 = jax.random.uniform(k_b1, (hidden_dim,), jnp.float32, -bound1, bound1)
    bound2 = 1.0 / jnp.sqrt(float(hidden_dim))
    w2 = jax.random.uniform(k_w2, (hidden_dim,), jnp.float32, -bound2, bound2)
    b2 = float(jax.random.uniform(k_b2, (), jnp.float32, -bound2, bound2))

    # Prior graph (DiGraph edges) baked into an adjacency matrix deterministically.
    prior_edges = [(0, 1), (1, 2), (2, 3), (0, 4), (4, 5), (5, 7)]
    prior_adj = jnp.zeros((num_vars, num_vars), jnp.float32)
    for i, j in prior_edges:
        prior_adj = prior_adj.at[i, j].set(1.0)

    causal_vars = jax.random.normal(k_x, (num_vars, hidden_dim), jnp.float32)

    out = enhanced_structure_learner(causal_vars, w1, b1, w2, b2, prior_adj, prior_weight)
    out = jax.block_until_ready(out)

    ref = _reference(causal_vars, w1, b1, w2, b2, prior_adj, prior_weight)
    assert out.shape == (num_vars, num_vars)
    # Tolerance accounts for the approximate EUP reciprocal in the in-kernel sigmoid.
    assert jnp.allclose(out, ref, rtol=2e-3, atol=2e-3), "kernel output mismatch vs reference"

    print("KERNEL_OK")
</pallas_src>

<mosaic_0001>
module attributes {stable_mosaic.version = 11 : i64} {
  func.func @_structure_kernel(%arg0: memref<8x32xf32, #tpu.memory_space<vmem>>, %arg1: memref<32x64xf32, #tpu.memory_space<vmem>>, %arg2: memref<1x32xf32, #tpu.memory_space<vmem>>, %arg3: memref<1x32xf32, #tpu.memory_space<vmem>>, %arg4: memref<8x8xf32, #tpu.memory_space<vmem>>, %arg5: memref<2xf32, #tpu.memory_space<smem>>, %arg6: memref<8x8xf32, #tpu.memory_space<vmem>>) attributes {dimension_semantics = [], scalar_prefetch = 0 : i64, scratch_operands = 0 : i64, tpu.core_type = #tpu.core_type<tc>} {
    %c0 = arith.constant 0 : index
    %c0_0 = arith.constant 0 : index
    %0 = vector.load %arg0[%c0, %c0_0] : memref<8x32xf32, #tpu.memory_space<vmem>>, vector<8x32xf32>
    %c0_1 = arith.constant 0 : index
    %c0_2 = arith.constant 0 : index
    %1 = vector.load %arg1[%c0_1, %c0_2] : memref<32x64xf32, #tpu.memory_space<vmem>>, vector<32x64xf32>
    %cst = arith.constant dense<0.000000e+00> : vector<8x64xf32>
    %2 = tpu.matmul %0, %1, %cst {dimension_numbers = #tpu.dot_dimension_numbers<[1], [0], [0], [1], [0, 0, 1, 1], [], []>} : vector<8x32xf32>, vector<32x64xf32>, vector<8x64xf32> -> vector<8x64xf32>
    %3 = vector.extract_strided_slice %2 {offsets = [0, 0], sizes = [8, 32], strides = [1, 1]} : vector<8x64xf32> to vector<8x32xf32>
    %c0_3 = arith.constant 0 : index
    %c0_4 = arith.constant 0 : index
    %4 = vector.load %arg2[%c0_3, %c0_4] : memref<1x32xf32, #tpu.memory_space<vmem>>, vector<1x32xf32>
    %5 = vector.broadcast %4 : vector<1x32xf32> to vector<8x32xf32>
    %6 = arith.addf %3, %5 : vector<8x32xf32>
    %7 = vector.extract_strided_slice %2 {offsets = [0, 32], sizes = [8, 32], strides = [1, 1]} : vector<8x64xf32> to vector<8x32xf32>
    %8 = vector.shape_cast %6 : vector<8x32xf32> to vector<8x1x32xf32>
    %9 = vector.shape_cast %7 : vector<8x32xf32> to vector<1x8x32xf32>
    %10 = vector.broadcast %8 : vector<8x1x32xf32> to vector<8x8x32xf32>
    %11 = vector.broadcast %9 : vector<1x8x32xf32> to vector<8x8x32xf32>
    %12 = arith.addf %10, %11 : vector<8x8x32xf32>
    %cst_5 = arith.constant 0.000000e+00 : f32
    %13 = vector.broadcast %cst_5 : f32 to vector<8x8x32xf32>
    %14 = arith.maximumf %12, %13 : vector<8x8x32xf32>
    %c0_6 = arith.constant 0 : index
    %c0_7 = arith.constant 0 : index
    %15 = vector.load %arg3[%c0_6, %c0_7] : memref<1x32xf32, #tpu.memory_space<vmem>>, vector<1x32xf32>
    %16 = vector.shape_cast %15 : vector<1x32xf32> to vector<1x1x32xf32>
    %17 = vector.broadcast %16 : vector<1x1x32xf32> to vector<8x8x32xf32>
    %18 = arith.mulf %14, %17 : vector<8x8x32xf32>
    %cst_8 = arith.constant dense<0.000000e+00> : vector<8x8xf32>
    %19 = vector.multi_reduction <add>, %18, %cst_8 [2] : vector<8x8x32xf32> to vector<8x8xf32>
    %c0_9 = arith.constant 0 : index
    %20 = memref.load %arg5[%c0_9] : memref<2xf32, #tpu.memory_space<smem>>
    %21 = vector.broadcast %20 : f32 to vector<8x8xf32>
    %22 = arith.addf %19, %21 : vector<8x8xf32>
    %cst_10 = arith.constant 0.000000e+00 : f32
    %23 = vector.broadcast %cst_10 : f32 to vector<8x8xf32>
    %24 = arith.subf %23, %22 : vector<8x8xf32>
    %25 = math.exp %24 : vector<8x8xf32>
    %cst_11 = arith.constant 1.000000e+00 : f32
    %26 = vector.broadcast %cst_11 : f32 to vector<8x8xf32>
    %27 = arith.addf %26, %25 : vector<8x8xf32>
    %28 = tpu.reciprocal %27 {approx = true} : vector<8x8xf32> -> vector<8x8xf32>
    %c1 = arith.constant 1 : index
    %29 = memref.load %arg5[%c1] : memref<2xf32, #tpu.memory_space<smem>>
    %cst_12 = arith.constant 1.000000e+00 : f32
    %30 = arith.subf %cst_12, %29 : f32
    %31 = vector.broadcast %30 : f32 to vector<8x8xf32>
    %32 = arith.mulf %31, %28 : vector<8x8xf32>
    %c0_13 = arith.constant 0 : index
    %c0_14 = arith.constant 0 : index
    %33 = vector.load %arg4[%c0_13, %c0_14] : memref<8x8xf32, #tpu.memory_space<vmem>>, vector<8x8xf32>
    %34 = vector.broadcast %29 : f32 to vector<8x8xf32>
    %35 = arith.mulf %34, %33 : vector<8x8xf32>
    %36 = arith.addf %32, %35 : vector<8x8xf32>
    %c0_15 = arith.constant 0 : index
    %c0_16 = arith.constant 0 : index
    %37 = vector.load %arg6[%c0_15, %c0_16] : memref<8x8xf32, #tpu.memory_space<vmem>>, vector<8x8xf32>
    tpu.vector_store %arg6[%c0_15, %c0_16], %36 {strides = array<i32>} : memref<8x8xf32, #tpu.memory_space<vmem>>, vector<8x8xf32>,
    return
  }
}

</mosaic_0001>

<llo_original>
// kernel: tpu_custom_call.1
$region0: #{tpu_custom_call.1}
  #allocation0 [shape = 'u32[]', space=smem, size = 0x4, offset = 0x4, fixed_abs, tag = 'smem constant byte address 0x4 - core index']
  #allocation1 [shape = 'u32[144,128]{1,0:T(1,128)}', space=vmem, size = 0x12000, scoped, tag = 'internal scratch']
  %s0 = inlined_call_operand.hbm [shape: f32[8,32], index: 0, kind: input, shape index: {}]
  %s1 = inlined_call_operand.hbm [shape: f32[32,64], index: 1, kind: input, shape index: {}]
  %s2 = inlined_call_operand.vmem [shape: f32[1,32], index: 2, kind: input, shape index: {}]
  %s3 = inlined_call_operand.vmem [shape: f32[1,32], index: 3, kind: input, shape index: {}]
  %s4 = inlined_call_operand.vmem [shape: f32[8,8], index: 4, kind: input, shape index: {}]
  %s5 = inlined_call_operand.vmem [shape: f32[2], index: 5, kind: input, shape index: {}]
  %s6 = inlined_call_operand.hbm [shape: f32[8,8], index: 6, kind: output, shape index: {}]
  %s7 = sld [smem:[#allocation0]]
  $region46: #{tpu_custom_call.1} parent=0
    _
  %s9 = ssub.s32 1, %s7
  %s10 = scalar_select 0, %s9, %s7
  $region1: #{tpu_custom_call.1} parent=0
    #allocation2 [shape = 'u8[4096]{0}', space=vmem, size = 0x1000, scoped, tag = 'input window, operand 0, single buffered']
    #allocation3 [shape = 's32[1]{0}', space=sflag, size = 0x4, scoped, tag = 'scoped memory for tpu_custom_call.1']
    #allocation4 [shape = 's32[1]{0}', space=sflag, size = 0x4, scoped, tag = 'scoped memory for tpu_custom_call.1']
    #allocation5 [shape = 's32[1]{0}', space=sflag, size = 0x4, scoped, tag = 'scoped memory for tpu_custom_call.1']
    #allocation6 [shape = 'u8[16384]{0}', space=vmem, size = 0x4000, scoped, tag = 'input window, operand 1, single buffered']
    #allocation7 [shape = 's32[1]{0}', space=sflag, size = 0x4, scoped, tag = 'scoped memory for tpu_custom_call.1']
    #allocation8 [shape = 'u8[512]{0}', space=smem, size = 0x200, scoped, tag = 'input window, operand 5, single buffered']
    #allocation9 [shape = 'u8[4096]{0}', space=vmem, size = 0x1000, scoped, tag = 'output window, operand 0, single buffered']
    %11 = vsyncpa [#allocation3], 0
    %12 = vsyncpa [#allocation7], 0
    %13 = vsyncpa [#allocation5], 0
    %14 = vsyncpa [#allocation4], 0
    // Predicated region
    $region2: #{tpu_custom_call.1} parent=1 // pred_check
      _
    $region3: #{tpu_custom_call.1} parent=1 // pred_check_branch
      %16 = sbr.rel (0) target = $region5
    $region4: #{tpu_custom_call.1} parent=1 // pred_region
      %s18 = ssub.s32 128, 128
      %19 = vsyncadd [#allocation3], %s18
      %s21 = sshll.u32 [#allocation2], 4
      %s22 = int_to_ptr.vmem [resolvable:$true] %s21
      %24 = dma.hbm_to_vmem [thread:$0]  %s0, 128, %s22, [#allocation3]
    $region5: #{tpu_custom_call.1} parent=1 // pred_fallthru
      _
    // Predicated region
    $region6: #{tpu_custom_call.1} parent=1 // pred_check
      _
    $region7: #{tpu_custom_call.1} parent=1 // pred_check_branch
      %26 = sbr.rel (0) target = $region9
    $region8: #{tpu_custom_call.1} parent=1 // pred_region
      %s28 = ssub.s32 512, 512
      %29 = vsyncadd [#allocation7], %s28
      %s30 = sshll.u32 [#allocation6], 4
      %s31 = int_to_ptr.vmem [resolvable:$true] %s30
      %36 = dma.hbm_to_vmem [thread:$0]  %s1, 512, %s31, [#allocation7], 128, 128, 8
    $region9: #{tpu_custom_call.1} parent=1 // pred_fallthru
      _
    // Predicated region
    $region10: #{tpu_custom_call.1} parent=1 // pred_check
      _
    $region11: #{tpu_custom_call.1} parent=1 // pred_check_branch
      %38 = sbr.rel (0) target = $region13
    $region12: #{tpu_custom_call.1} parent=1 // pred_region
      _
    $region13: #{tpu_custom_call.1} parent=1 // pred_fallthru
      _
    // Predicated region
    $region14: #{tpu_custom_call.1} parent=1 // pred_check
      _
    $region15: #{tpu_custom_call.1} parent=1 // pred_check_branch
      %40 = sbr.rel (0) target = $region17
    $region16: #{tpu_custom_call.1} parent=1 // pred_region
      _
    $region17: #{tpu_custom_call.1} parent=1 // pred_fallthru
      _
    // Predicated region
    $region18: #{tpu_custom_call.1} parent=1 // pred_check
      _
    $region19: #{tpu_custom_call.1} parent=1 // pred_check_branch
      %42 = sbr.rel (0) target = $region21
    $region20: #{tpu_custom_call.1} parent=1 // pred_region
      _
    $region21: #{tpu_custom_call.1} parent=1 // pred_fallthru
      _
    // Predicated region
    $region22: #{tpu_custom_call.1} parent=1 // pred_check
      _
    $region23: #{tpu_custom_call.1} parent=1 // pred_check_branch
      %44 = sbr.rel (0) target = $region25
    $region24: #{tpu_custom_call.1} parent=1 // pred_region
      %s46 = ssub.s32 16, 16
      %47 = vsyncadd [#allocation5], %s46
      %s49 = sshll.u32 %s5, 4
      %s50 = int_to_ptr.vmem [resolvable:$true] %s49
      %52 = dma.vmem_to_smem %s50, 16, [#allocation8], [#allocation5]
    $region25: #{tpu_custom_call.1} parent=1 // pred_fallthru
      _
    // Predicated region
    $region26: #{tpu_custom_call.1} parent=1 // pred_check
      _
    $region27: #{tpu_custom_call.1} parent=1 // pred_check_branch
      %54 = sbr.rel (0) target = $region29
    $region28: #{tpu_custom_call.1} parent=1 // pred_region
      %55 = dma.done [#allocation3], 128
    $region29: #{tpu_custom_call.1} parent=1 // pred_fallthru
      _
    // Predicated region
    $region30: #{tpu_custom_call.1} parent=1 // pred_check
      _
    $region31: #{tpu_custom_call.1} parent=1 // pred_check_branch
      %57 = sbr.rel (0) target = $region33
    $region32: #{tpu_custom_call.1} parent=1 // pred_region
      %58 = dma.done [#allocation7], 512
    $region33: #{tpu_custom_call.1} parent=1 // pred_fallthru
      _
    // Predicated region
    $region34: #{tpu_custom_call.1} parent=1 // pred_check
      _
    $region35: #{tpu_custom_call.1} parent=1 // pred_check_branch
      %60 = sbr.rel (0) target = $region37
    $region36: #{tpu_custom_call.1} parent=1 // pred_region
      %61 = dma.done [#allocation5], 16
    $region37: #{tpu_custom_call.1} parent=1 // pred_fallthru
      _
    %62 = sfence
    %v63 = vld [vmem:[#allocation2] sm:$0xff]
    %v64 = vld [vmem:[#allocation6] sm:$0xff]
    %v65 = vld [vmem:[#allocation6 + $0x8] sm:$0xff]
    %v66 = vld [vmem:[#allocation6 + $0x10] sm:$0xff]
    %v67 = vld [vmem:[#allocation6 + $0x18] sm:$0xff]
    %vm68 = vcmask 261120
    %v70 = vsel %vm68, %v63, 0
    %72 = vmatprep.subr.mxu0 0.0
    %73 = vmatpush1.msra.mxu0 %v64
    %74 = vmatprep.subr.mxu0 0.0
    %75 = vmatpush1.msra.mxu0 %v65
    %76 = vmatprep.subr.mxu0 0.0
    %77 = vmatpush1.msra.mxu0 %v66
    %78 = vmatprep.subr.mxu0 0.0
    %79 = vmatpush1.msra.mxu0 %v67
    %80 = vmatprep.subr.mxu0 0.0
    %81 = vmatpush1.msra.mxu0 0.0
    %82 = vmatprep.subr.mxu0 0.0
    %83 = vmatpush1.msra.mxu0 0.0
    %84 = vmatprep.subr.mxu0 0.0
    %85 = vmatpush1.msra.mxu0 0.0
    %86 = vmatprep.subr.mxu0 0.0
    %87 = vmatpush1.msra.mxu0 0.0
    %88 = vmatprep.subr.mxu0 0.0
    %89 = vmatpush1.msra.mxu0 0.0
    %90 = vmatprep.subr.mxu0 0.0
    %91 = vmatpush1.msra.mxu0 0.0
    %92 = vmatprep.subr.mxu0 0.0
    %93 = vmatpush1.msra.mxu0 0.0
    %94 = vmatprep.subr.mxu0 0.0
    %95 = vmatpush1.msra.mxu0 0.0
    %96 = vmatprep.subr.mxu0 0.0
    %97 = vmatpush1.msra.mxu0 0.0
    %98 = vmatprep.subr.mxu0 0.0
    %99 = vmatpush1.msra.mxu0 0.0
    %100 = vmatprep.subr.mxu0 0.0
    %101 = vmatpush1.msra.mxu0 0.0
    %102 = vmatprep.subr.mxu0 0.0
    %103 = vmatpush1.msra.mxu0 0.0
    %104 = vmatprep.subr.mxu0 0.0
    %105 = vmatpush1.msra.mxu0 0.0
    %106 = vmatprep.subr.mxu0 0.0
    %107 = vmatpush1.msra.mxu0 0.0
    %108 = vmatprep.subr.mxu0 0.0
    %109 = vmatpush1.msra.mxu0 0.0
    %110 = vmatprep.subr.mxu0 0.0
    %111 = vmatpush1.msra.mxu0 0.0
    %112 = vmatprep.subr.mxu0 0.0
    %113 = vmatpush1.msra.mxu0 0.0
    %114 = vmatprep.subr.mxu0 0.0
    %115 = vmatpush1.msra.mxu0 0.0
    %116 = vmatprep.subr.mxu0 0.0
    %117 = vmatpush1.msra.mxu0 0.0
    %118 = vmatprep.subr.mxu0 0.0
    %119 = vmatpush1.msra.mxu0 0.0
    %120 = vmatprep.subr.mxu0 0.0
    %121 = vmatpush1.msra.mxu0 0.0
    %122 = vmatprep.subr.mxu0 0.0
    %123 = vmatpush1.msra.mxu0 0.0
    %124 = vmatprep.subr.mxu0 0.0
    %125 = vmatpush1.msra.mxu0 0.0
    %126 = vmatprep.subr.mxu0 0.0
    %127 = vmatpush1.msra.mxu0 0.0
    %128 = vmatprep.subr.mxu0 0.0
    %129 = vmatpush1.msra.mxu0 0.0
    %130 = vmatprep.subr.mxu0 0.0
    %131 = vmatpush1.msra.mxu0 0.0
    %132 = vmatprep.subr.mxu0 0.0
    %133 = vmatpush1.msra.mxu0 0.0
    %134 = vmatprep.subr.mxu0 0.0
    %135 = vmatpush1.msra.mxu0 0.0
    %136 = vmatprep.mubr.f32.mxu0 0.0
    %137 = vmatmul.mubr.f32.gmra.mrb[0].mxu0 %v70
    %v138 = vpop.f32.mrb[0].mxu0
    %v139 = vadd.f32 0.0, %v138
    %v140 = vpop.f32.mrb[0].mxu0
    %141 = vdwg.mxu0
    %v142 = vld [vmem:[%s2] sm:$0x1]
    %v144 = vlaneseq
    %v145 = vshrl.u32 %v144, 7
    %v146 = vsub.s32 0, %v145
    %v147 = vrot.slane %v142, %v146
    %v149 = vadd.f32 %v139, %v147
    %v151 = vcombine.high %v149, %v149
    %v153 = vunpack.c.l.s4 1966171168
    %v154 = vunpack.c.0.s8 %v153
    %v155 = vlaneseq
    %v156 = vshrl.u32 %v155, 7
    %v157 = vsub.s32 %v154, %v156
    %v158 = vrot.slane %v149, %v157
    %v160 = vunpack.c.l.s4 1966171168
    %v161 = vunpack.c.0.s8 %v160
    %v162 = vlaneseq
    %v163 = vshrl.u32 %v162, 7
    %v164 = vsub.s32 %v161, %v163
    %v165 = vrot.slane %v151, %v164
    %v166 = vcombine.high %v158, %v158
    %v167 = vcombine.high %v165, %v165
    %v169 = vunpack.c.l.s4 1966171168
    %v170 = vunpack.c.0.s8 %v169
    %v171 = vlaneseq
    %v172 = vshrl.u32 %v171, 7
    %v173 = vsub.s32 %v170, %v172
    %v174 = vrot.slane %v158, %v173
    %v176 = vunpack.c.l.s4 1966171168
    %v177 = vunpack.c.0.s8 %v176
    %v178 = vlaneseq
    %v179 = vshrl.u32 %v178, 7
    %v180 = vsub.s32 %v177, %v179
    %v181 = vrot.slane %v165, %v180
    %v183 = vunpack.c.l.s4 1966171168
    %v184 = vunpack.c.0.s8 %v183
    %v185 = vlaneseq
    %v186 = vshrl.u32 %v185, 7
    %v187 = vsub.s32 %v184, %v186
    %v188 = vrot.slane %v166, %v187
    %v190 = vunpack.c.l.s4 1966171168
    %v191 = vunpack.c.0.s8 %v190
    %v192 = vlaneseq
    %v193 = vshrl.u32 %v192, 7
    %v194 = vsub.s32 %v191, %v193
    %v195 = vrot.slane %v167, %v194
    %v196 = vcombine.high %v174, %v174
    %v197 = vcombine.high %v181, %v181
    %v198 = vcombine.high %v188, %v188
    %v199 = vcombine.high %v195, %v195
    %v200 = vlaneseq
    %v201 = vshrl.u32 %v200, 7
    %v202 = vsub.s32 0, %v201
    %v203 = vrot.slane %v174, %v202
    %v204 = vlaneseq
    %v205 = vshrl.u32 %v204, 7
    %v206 = vsub.s32 0, %v205
    %v207 = vrot.slane %v188, %v206
    %v208 = vlaneseq
    %v209 = vshrl.u32 %v208, 7
    %v210 = vsub.s32 0, %v209
    %v211 = vrot.slane %v196, %v210
    %v212 = vlaneseq
    %v213 = vshrl.u32 %v212, 7
    %v214 = vsub.s32 0, %v213
    %v215 = vrot.slane %v198, %v214
    %v216 = vlaneseq
    %v217 = vshrl.u32 %v216, 7
    %v218 = vsub.s32 0, %v217
    %v219 = vrot.slane %v181, %v218
    %v220 = vlaneseq
    %v221 = vshrl.u32 %v220, 7
    %v222 = vsub.s32 0, %v221
    %v223 = vrot.slane %v195, %v222
    %v224 = vlaneseq
    %v225 = vshrl.u32 %v224, 7
    %v226 = vsub.s32 0, %v225
    %v227 = vrot.slane %v197, %v226
    %v228 = vlaneseq
    %v229 = vshrl.u32 %v228, 7
    %v230 = vsub.s32 0, %v229
    %v231 = vrot.slane %v199, %v230
    %241 = vrot.lane.b32.xlu0 %v139, 96
    %v242 = vpop.permute.xlu0 %241
    %v244 = vadd.f32 %v203, %v242
    %v245 = vadd.f32 %v207, %v242
    %v246 = vadd.f32 %v211, %v242
    %v247 = vadd.f32 %v215, %v242
    %v248 = vadd.f32 %v219, %v242
    %v249 = vadd.f32 %v223, %v242
    %v250 = vadd.f32 %v227, %v242
    %v251 = vadd.f32 %v231, %v242
    %v252 = vmax.f32 %v244, 0.0
    %v253 = vmax.f32 %v245, 0.0
    %v254 = vmax.f32 %v246, 0.0
    %v255 = vmax.f32 %v247, 0.0
    %v256 = vmax.f32 %v248, 0.0
    %v257 = vmax.f32 %v249, 0.0
    %v258 = vmax.f32 %v250, 0.0
    %v259 = vmax.f32 %v251, 0.0
    %v260 = vld [vmem:[%s3] sm:$0x1]
    %v262 = vlaneseq
    %v263 = vshrl.u32 %v262, 7
    %v264 = vsub.s32 0, %v263
    %v265 = vrot.slane %v260, %v264
    %v267 = vmul.f32 %v252, %v265
    %v268 = vmul.f32 %v253, %v265
    %v269 = vmul.f32 %v254, %v265
    %v270 = vmul.f32 %v255, %v265
    %v271 = vmul.f32 %v256, %v265
    %v272 = vmul.f32 %v257, %v265
    %v273 = vmul.f32 %v258, %v265
    %v274 = vmul.f32 %v259, %v265
    %v275 = vsel %vm68, %v267, 0.0
    %276 = vadd.xlane.f32.xlu0 %v275
    %v277 = vpop.xlane.xlu0 %276
    %v278 = vsel %vm68, %v268, 0.0
    %279 = vadd.xlane.f32.xlu0 %v278
    %v280 = vpop.xlane.xlu0 %279
    %v281 = vsel %vm68, %v269, 0.0
    %282 = vadd.xlane.f32.xlu0 %v281
    %v283 = vpop.xlane.xlu0 %282
    %v284 = vsel %vm68, %v270, 0.0
    %285 = vadd.xlane.f32.xlu0 %v284
    %v286 = vpop.xlane.xlu0 %285
    %v287 = vsel %vm68, %v271, 0.0
    %288 = vadd.xlane.f32.xlu0 %v287
    %v289 = vpop.xlane.xlu0 %288
    %v290 = vsel %vm68, %v272, 0.0
    %291 = vadd.xlane.f32.xlu0 %v290
    %v292 = vpop.xlane.xlu0 %291
    %v293 = vsel %vm68, %v273, 0.0
    %294 = vadd.xlane.f32.xlu0 %v293
    %v295 = vpop.xlane.xlu0 %294
    %v296 = vsel %vm68, %v274, 0.0
    %297 = vadd.xlane.f32.xlu0 %v296
    %v298 = vpop.xlane.xlu0 %297
    %s299 = sld [smem:[#allocation8]]
    %v300 = vstv %s299
    %v301 = vadd.f32 %v277, %v300
    %v302 = vadd.f32 %v280, %v300
    %v303 = vadd.f32 %v283, %v300
    %v304 = vadd.f32 %v286, %v300
    %v305 = vadd.f32 %v289, %v300
    %v306 = vadd.f32 %v292, %v300
    %v307 = vadd.f32 %v295, %v300
    %v308 = vadd.f32 %v298, %v300
    %v309 = vsub.f32 0.0, %v301
    %v310 = vsub.f32 0.0, %v302
    %v311 = vsub.f32 0.0, %v303
    %v312 = vsub.f32 0.0, %v304
    %v313 = vsub.f32 0.0, %v305
    %v314 = vsub.f32 0.0, %v306
    %v315 = vsub.f32 0.0, %v307
    %v316 = vsub.f32 0.0, %v308
    %v317 = vmul.f32 %v309, 1.442695
    %v318 = vpow.pop %v317
    %v319 = vmul.f32 %v310, 1.442695
    %v320 = vpow.pop %v319
    %v321 = vmul.f32 %v311, 1.442695
    %v322 = vpow.pop %v321
    %v323 = vmul.f32 %v312, 1.442695
    %v324 = vpow.pop %v323
    %v325 = vmul.f32 %v313, 1.442695
    %v326 = vpow.pop %v325
    %v327 = vmul.f32 %v314, 1.442695
    %v328 = vpow.pop %v327
    %v329 = vmul.f32 %v315, 1.442695
    %v330 = vpow.pop %v329
    %v331 = vmul.f32 %v316, 1.442695
    %v332 = vpow.pop %v331
    %v333 = vadd.f32 %v318, 1.0
    %v334 = vadd.f32 %v320, 1.0
    %v335 = vadd.f32 %v322, 1.0
    %v336 = vadd.f32 %v324, 1.0
    %v337 = vadd.f32 %v326, 1.0
    %v338 = vadd.f32 %v328, 1.0
    %v339 = vadd.f32 %v330, 1.0
    %v340 = vadd.f32 %v332, 1.0
    %v341 = vrcp.pop %v333
    %v342 = vrcp.pop %v334
    %v343 = vrcp.pop %v335
    %v344 = vrcp.pop %v336
    %v345 = vrcp.pop %v337
    %v346 = vrcp.pop %v338
    %v347 = vrcp.pop %v339
    %v348 = vrcp.pop %v340
    %s349 = sld [smem:[#allocation8 + $0x1]]
    %s350 = ssub.f32 1.0, %s349
    %v351 = vstv %s350
    %v352 = vmul.f32 %v351, %v341
    %v353 = vmul.f32 %v351, %v342
    %v354 = vmul.f32 %v351, %v343
    %v355 = vmul.f32 %v351, %v344
    %v356 = vmul.f32 %v351, %v345
    %v357 = vmul.f32 %v351, %v346
    %v358 = vmul.f32 %v351, %v347
    %v359 = vmul.f32 %v351, %v348
    %v360 = vld [vmem:[%s4] sm:$0xff]
    %v361 = vstv %s349
    %v362 = vmul.f32 %v361, %v360
    %v364 = vlaneseq
    %v365 = vshrl.u32 %v364, 7
    %v366 = vsub.s32 0, %v365
    %v367 = vrot.slane %v362, %v366
    %369 = vbcast.lane.b32.xlu0 %v367, 256
    %v370 = vpop.permute.xlu0 %369
    %v371 = vlaneseq
    %v372 = vshrl.u32 %v371, 7
    %v373 = vsub.s32 1, %v372
    %v374 = vrot.slane %v362, %v373
    %376 = vbcast.lane.b32.xlu0 %v374, 256
    %v377 = vpop.permute.xlu0 %376
    %v378 = vlaneseq
    %v379 = vshrl.u32 %v378, 7
    %v380 = vsub.s32 2, %v379
    %v381 = vrot.slane %v362, %v380
    %383 = vbcast.lane.b32.xlu0 %v381, 256
    %v384 = vpop.permute.xlu0 %383
    %v385 = vlaneseq
    %v386 = vshrl.u32 %v385, 7
    %v387 = vsub.s32 3, %v386
    %v388 = vrot.slane %v362, %v387
    %390 = vbcast.lane.b32.xlu0 %v388, 256
    %v391 = vpop.permute.xlu0 %390
    %v392 = vlaneseq
    %v393 = vshrl.u32 %v392, 7
    %v394 = vsub.s32 4, %v393
    %v395 = vrot.slane %v362, %v394
    %397 = vbcast.lane.b32.xlu0 %v395, 256
    %v398 = vpop.permute.xlu0 %397
    %v399 = vlaneseq
    %v400 = vshrl.u32 %v399, 7
    %v401 = vsub.s32 5, %v400
    %v402 = vrot.slane %v362, %v401
    %404 = vbcast.lane.b32.xlu0 %v402, 256
    %v405 = vpop.permute.xlu0 %404
    %v406 = vlaneseq
    %v407 = vshrl.u32 %v406, 7
    %v408 = vsub.s32 6, %v407
    %v409 = vrot.slane %v362, %v408
    %411 = vbcast.lane.b32.xlu0 %v409, 256
    %v412 = vpop.permute.xlu0 %411
    %v413 = vlaneseq
    %v414 = vshrl.u32 %v413, 7
    %v415 = vsub.s32 7, %v414
    %v416 = vrot.slane %v362, %v415
    %418 = vbcast.lane.b32.xlu0 %v416, 256
    %v419 = vpop.permute.xlu0 %418
    %v428 = vadd.f32 %v352, %v370
    %v429 = vadd.f32 %v353, %v377
    %v430 = vadd.f32 %v354, %v384
    %v431 = vadd.f32 %v355, %v391
    %v432 = vadd.f32 %v356, %v398
    %v433 = vadd.f32 %v357, %v405
    %v434 = vadd.f32 %v358, %v412
    %v435 = vadd.f32 %v359, %v419
    %444 = vset.pattern.permute.xlu0 0
    %445 = vperm.xlu0 %444, %v428
    %v446 = vpop.permute.xlu0 %445
    %447 = vset.pattern.permute.xlu0 0
    %448 = vperm.xlu0 %447, %v429
    %v449 = vpop.permute.xlu0 %448
    %450 = vset.pattern.permute.xlu0 0
    %451 = vperm.xlu0 %450, %v430
    %v452 = vpop.permute.xlu0 %451
    %453 = vset.pattern.permute.xlu0 0
    %454 = vperm.xlu0 %453, %v431
    %v455 = vpop.permute.xlu0 %454
    %456 = vset.pattern.permute.xlu0 0
    %457 = vperm.xlu0 %456, %v432
    %v458 = vpop.permute.xlu0 %457
    %459 = vset.pattern.permute.xlu0 0
    %460 = vperm.xlu0 %459, %v433
    %v461 = vpop.permute.xlu0 %460
    %462 = vset.pattern.permute.xlu0 0
    %463 = vperm.xlu0 %462, %v434
    %v464 = vpop.permute.xlu0 %463
    %465 = vset.pattern.permute.xlu0 0
    %466 = vperm.xlu0 %465, %v435
    %v467 = vpop.permute.xlu0 %466
    %v468 = vlaneseq
    %v469 = vand.u32 %v468, 127
    %v470 = vlaneseq
    %v471 = vshrl.u32 %v470, 7
    %v472 = vsub.s32 %v469, %v471
    %v473 = vrot.slane %v446, %v472
    %v474 = vlaneseq
    %v475 = vshrl.u32 %v474, 7
    %v476 = vsub.s32 %v469, %v475
    %v477 = vrot.slane %v449, %v476
    %v478 = vlaneseq
    %v479 = vshrl.u32 %v478, 7
    %v480 = vsub.s32 %v469, %v479
    %v481 = vrot.slane %v452, %v480
    %v482 = vlaneseq
    %v483 = vshrl.u32 %v482, 7
    %v484 = vsub.s32 %v469, %v483
    %v485 = vrot.slane %v455, %v484
    %v486 = vlaneseq
    %v487 = vshrl.u32 %v486, 7
    %v488 = vsub.s32 %v469, %v487
    %v489 = vrot.slane %v458, %v488
    %v490 = vlaneseq
    %v491 = vshrl.u32 %v490, 7
    %v492 = vsub.s32 %v469, %v491
    %v493 = vrot.slane %v461, %v492
    %v494 = vlaneseq
    %v495 = vshrl.u32 %v494, 7
    %v496 = vsub.s32 %v469, %v495
    %v497 = vrot.slane %v464, %v496
    %v498 = vlaneseq
    %v499 = vshrl.u32 %v498, 7
    %v500 = vsub.s32 %v469, %v499
    %v501 = vrot.slane %v467, %v500
    %vm502 = vcmask 1041409
    %v503 = vsel %vm502, %v477, %v473
    %vm504 = vcmask 1042434
    %v505 = vsel %vm504, %v481, %v503
    %vm506 = vcmask 1043459
    %v507 = vsel %vm506, %v485, %v505
    %vm508 = vcmask 1044484
    %v509 = vsel %vm508, %v489, %v507
    %vm510 = vcmask 1045509
    %v511 = vsel %vm510, %v493, %v509
    %vm512 = vcmask 1046534
    %v513 = vsel %vm512, %v497, %v511
    %vm514 = vcmask 1047559
    %v515 = vsel %vm514, %v501, %v513
    %vm517 = vcmask 64512
    %518 = vst.msk [vmem:[#allocation9] sm:$0xff] %vm517, %v515
    // Predicated region
    $region38: #{tpu_custom_call.1} parent=1 // pred_check
      _
    $region39: #{tpu_custom_call.1} parent=1 // pred_check_branch
      %520 = sbr.rel (0) target = $region41
    $region40: #{tpu_custom_call.1} parent=1 // pred_region
      %s522 = ssub.s32 128, 128
      %523 = vsyncadd [#allocation4], %s522
      %s525 = sshll.u32 [#allocation9], 4
      %s526 = int_to_ptr.vmem [resolvable:$true] %s525
      %528 = dma.vmem_to_hbm [thread:$0]  %s526, 128, %s6, [#allocation4]
    $region41: #{tpu_custom_call.1} parent=1 // pred_fallthru
      _
    // Predicated region
    $region42: #{tpu_custom_call.1} parent=1 // pred_check
      _
    $region43: #{tpu_custom_call.1} parent=1 // pred_check_branch
      %530 = sbr.rel (0) target = $region45
    $region44: #{tpu_custom_call.1} parent=1 // pred_region
      %531 = dma.done [#allocation4], 128
    $region45: #{tpu_custom_call.1} parent=1 // pred_fallthru
      _
    %532 = vsyncpa [#allocation3], 1
    %533 = vsyncpa [#allocation7], 1
    %534 = vsyncpa [#allocation4], 1
    %535 = vsyncpa [#allocation5], 1

</llo_original>
